<compile_context>
chip_gen: v6e
topology: v6e:2x2x1
jax: 0.10.0
libtpu: 0.0.40
codegen_flags: <defaults>
</compile_context>

<pallas_src>
import functools

import jax
import jax.numpy as jnp
from jax import lax
from jax.experimental import pallas as pl
from jax.experimental.pallas import tpu as pltpu

ALPHA = 0.5
BETA = 0.5

LANE = 128
SUBLANE = 8
ALIGN = SUBLANE * LANE      # 1024 elements: minimum Pallas-aligned unit
CHUNK_R = 256               # rows per in-kernel compute chunk (32 vregs/input)


def _default_max_tile_rows():
    """Rows (of 128 lanes) DMA'd per grid step.

    4096 rows = 2 MiB per f32 input tile -> 8 MiB resident with double
    buffering of both inputs: >=90% of the HBM roofline on v5e/v6e and inside
    v5e's 16 MiB scoped-VMEM default.  On v7x the fixed per-step overhead
    dominates at 3.2 TB/s, so use 8192 rows (4 MiB/input tile, 16 MiB
    resident, still under the 32 MiB scoped default).
    """
    kind = ""
    try:
        kind = jax.devices()[0].device_kind.lower()
    except Exception:
        pass
    return 8192 if "v7" in kind else 4096


def _sigmoid_f32(x):
    # sigmoid(x) == 0.5*tanh(x/2) + 0.5 : one EUP op + cheap VPU affine,
    # instead of a possible exp + reciprocal lowering (2 EUP pushes).
    return 0.5 * jnp.tanh(0.5 * x) + 0.5


def _tversky_partial_kernel(x_ref, t_ref, out_ref, *, rows, tile_r,
                            blocks_per_split, alpha, beta, need_mask):
    """Accumulates [sum(s*t), alpha*sum(s)+beta*sum(t)] into the per-split
    (2, 8, 128) output block (pattern P3: the output block is the accumulator)."""
    c = pl.program_id(0)   # split: "parallel" -> one per TensorCore on v7x
    i = pl.program_id(1)   # row-block within the split: reduction axis

    @pl.when(i == 0)
    def _():
        out_ref[...] = jnp.zeros_like(out_ref)

    def accumulate(masked):
        base = (c * blocks_per_split + i) * tile_r   # global row of this block

        def fold(xv, tv, row0, nrows):
            s = _sigmoid_f32(xv.astype(jnp.float32))
            t = tv.astype(jnp.float32)
            if masked:
                # Zero rows past the true row count (covers the partial last
                # block and any phantom block of the 2-way split).
                rid = lax.broadcasted_iota(jnp.int32, (nrows, LANE), 0)
                keep = (row0 + rid) < rows
                s = jnp.where(keep, s, 0.0)
                t = jnp.where(keep, t, 0.0)
            g = nrows // SUBLANE
            # Fold down to vreg-shaped (8,128) partials: pure VPU adds,
            # no cross-lane traffic in the hot loop.
            p_st = (s * t).reshape(g, SUBLANE, LANE).sum(axis=0)
            p_s = s.reshape(g, SUBLANE, LANE).sum(axis=0)
            p_t = t.reshape(g, SUBLANE, LANE).sum(axis=0)
            return p_st, p_s, p_t

        zero = jnp.zeros((SUBLANE, LANE), jnp.float32)
        acc = (zero, zero, zero)

        n_full = tile_r // CHUNK_R
        rem = tile_r % CHUNK_R          # static; always a multiple of 8

        if n_full > 0:
            def body(j, carry):
                a_st, a_s, a_t = carry
                r0 = pl.multiple_of(j * CHUNK_R, CHUNK_R)
                p_st, p_s, p_t = fold(x_ref[pl.ds(r0, CHUNK_R), :],
                                      t_ref[pl.ds(r0, CHUNK_R), :],
                                      base + r0, CHUNK_R)
                return (a_st + p_st, a_s + p_s, a_t + p_t)
            acc = lax.fori_loop(0, n_full, body, acc)

        if rem > 0:
            r0 = n_full * CHUNK_R
            p_st, p_s, p_t = fold(x_ref[pl.ds(r0, rem), :],
                                  t_ref[pl.ds(r0, rem), :],
                                  base + r0, rem)
            acc = (acc[0] + p_st, acc[1] + p_s, acc[2] + p_t)

        a_st, a_s, a_t = acc
        out_ref[0, 0] += a_st
        # alpha/beta weighting applied once per step on (8,128) partials only.
        out_ref[0, 1] += alpha * a_s + beta * a_t

    if need_mask:
        logical = c * blocks_per_split + i
        is_partial = (rows - logical * tile_r) < tile_r
        # Only the (at most one) partial / phantom block runs the masked path.
        @pl.when(jnp.logical_not(is_partial))
        def _():
            accumulate(False)

        @pl.when(is_partial)
        def _():
            accumulate(True)
    else:
        accumulate(False)


def _partial_sums_pallas(x2, t2, alpha, beta, max_tile_rows):
    """(TP, W) partial sums over a (rows, 128) view; rows is a multiple of 8."""
    rows = x2.shape[0]
    tile_r = min(int(max_tile_rows), rows)
    num_blocks = pl.cdiv(rows, tile_r)
    num_splits = 2 if num_blocks >= 2 else 1     # both TCs on v7x megacore
    bps = pl.cdiv(num_blocks, num_splits)        # blocks per split
    need_mask = (num_splits * bps * tile_r) != rows

    if num_splits * bps > num_blocks:
        # Odd block count split in two: clamp so the phantom trailing block
        # re-reads a valid block; its contribution is masked to zero.
        def in_idx(c, i):
            return (jnp.minimum(c * bps + i, num_blocks - 1), 0)
    else:
        def in_idx(c, i):
            return (c * bps + i, 0)

    kernel = functools.partial(
        _tversky_partial_kernel,
        rows=int(rows), tile_r=int(tile_r), blocks_per_split=int(bps),
        alpha=float(alpha), beta=float(beta), need_mask=bool(need_mask))

    itemsizes = jnp.dtype(x2.dtype).itemsize + jnp.dtype(t2.dtype).itemsize
    in_bytes = 2 * tile_r * LANE * itemsizes       # double-buffered inputs
    vmem_limit = int(min(64 << 20, max(32 << 20, 2 * in_bytes)))

    partials = pl.pallas_call(
        kernel,
        out_shape=jax.ShapeDtypeStruct((num_splits, 2, SUBLANE, LANE),
                                       jnp.float32),
        grid=(num_splits, bps),
        in_specs=[
            pl.BlockSpec((tile_r, LANE), in_idx),
            pl.BlockSpec((tile_r, LANE), in_idx),
        ],
        out_specs=pl.BlockSpec((1, 2, SUBLANE, LANE),
                               lambda c, i: (c, 0, 0, 0)),
        compiler_params=pltpu.CompilerParams(
            dimension_semantics=("parallel", "arbitrary"),
            vmem_limit_bytes=vmem_limit),
    )(x2, t2)

    return jnp.sum(partials[:, 0]), jnp.sum(partials[:, 1])


def tversky_loss(inputs, targets, smooth=1.0, alpha=ALPHA, beta=BETA,
                 max_tile_rows=None):
    if max_tile_rows is None:
        max_tile_rows = _default_max_tile_rows()

    x = inputs.reshape(-1)
    t = targets.reshape(-1)
    n = x.shape[0]
    n_main = (n // ALIGN) * ALIGN        # 1024-aligned prefix -> Pallas kernel

    tp = jnp.float32(0.0)
    w = jnp.float32(0.0)

    if n_main > 0:
        rows = n_main // LANE
        x2 = x[:n_main].reshape(rows, LANE)   # free reshape, no padding copy
        t2 = t[:n_main].reshape(rows, LANE)
        tp_m, w_m = _partial_sums_pallas(x2, t2, alpha, beta, max_tile_rows)
        tp = tp + tp_m
        w = w + w_m

    if n_main != n:
        # < 1024 trailing elements: fold in with plain JAX (negligible work,
        # avoids padding / copying the whole tensor in HBM).
        xt = x[n_main:].astype(jnp.float32)
        tt = t[n_main:].astype(jnp.float32)
        st = _sigmoid_f32(xt)
        tp = tp + jnp.sum(st * tt)
        w = w + alpha * jnp.sum(st) + beta * jnp.sum(tt)

    # TP + alpha*FP + beta*FN == (1-alpha-beta)*TP + alpha*sum(s) + beta*sum(t)
    denom = (1.0 - alpha - beta) * tp + w + smooth
    tversky = (tp + smooth) / denom
    return 1.0 - tversky


def _reference(inputs, targets, smooth=1.0, alpha=ALPHA, beta=BETA):
    s = jax.nn.sigmoid(inputs.reshape(-1).astype(jnp.float32))
    t = targets.reshape(-1).astype(jnp.float32)
    tp = jnp.sum(s * t)
    fp = jnp.sum((1.0 - t) * s)
    fn = jnp.sum(t * (1.0 - s))
    tversky = (tp + smooth) / (tp + alpha * fp + beta * fn + smooth)
    return 1.0 - tversky


def _check(shape, key, *, smooth=1.0, alpha=ALPHA, beta=BETA,
           max_tile_rows=None):
    k1, k2 = jax.random.split(key)
    inputs = jax.random.normal(k1, shape, dtype=jnp.float32)
    targets = (jax.random.uniform(k2, shape) > 0.5).astype(jnp.float32)
    got = jax.block_until_ready(
        tversky_loss(inputs, targets, smooth=smooth, alpha=alpha, beta=beta,
                     max_tile_rows=max_tile_rows))
    want = jax.block_until_ready(
        _reference(inputs, targets, smooth=smooth, alpha=alpha, beta=beta))
    assert jnp.allclose(got, want, rtol=1e-5, atol=1e-5), (shape, got, want)
    return got


if __name__ == "__main__":
    key = jax.random.PRNGKey(0)
    k_main, k_a, k_b = jax.random.split(key, 3)

    # Module has no parameters; inputs are raw logits, targets binary masks.
    _check((2, 4, 16, 16), k_main)

    # Exercise the non-default paths with a tiny forced tile:
    #  - non-1024-aligned size (JAX tail fold) + partial last block (row mask)
    _check((3, 5, 17, 13), k_a, max_tile_rows=16)
    #  - two-way split with a phantom trailing block + non-default alpha/beta
    _check((1, 5200), k_b, smooth=0.5, alpha=0.7, beta=0.3, max_tile_rows=16)

    print("KERNEL_OK")
</pallas_src>

<mosaic_0001>
module attributes {stable_mosaic.version = 11 : i64} {
  func.func @_tversky_partial_kernel(%arg0: i32, %arg1: i32, %arg2: memref<16x128xf32, #tpu.memory_space<vmem>>, %arg3: memref<16x128xf32, #tpu.memory_space<vmem>>, %arg4: memref<1x2x8x128xf32, #tpu.memory_space<vmem>>) attributes {dimension_semantics = [#tpu.dimension_semantics<parallel>, #tpu.dimension_semantics<arbitrary>], iteration_bounds = array<i64: 1, 1>, scalar_prefetch = 0 : i64, scratch_operands = 0 : i64, tpu.core_type = #tpu.core_type<tc>, window_params = [{transform_indices = @transform_0, window_bounds = array<i64: 16, 128>}, {transform_indices = @transform_1, window_bounds = array<i64: 16, 128>}, {transform_indices = @transform_2, window_bounds = array<i64: 1, 2, 8, 128>}]} {
    %c0_i32 = arith.constant 0 : i32
    %0 = arith.cmpi eq, %arg1, %c0_i32 : i32
    %1 = arith.extui %0 : i1 to i32
    %c0_i32_0 = arith.constant 0 : i32
    %2 = arith.cmpi ne, %1, %c0_i32_0 : i32
    scf.if %2 {
      %cst_27 = arith.constant 0.000000e+00 : f32
      %40 = vector.broadcast %cst_27 : f32 to vector<1x2x8x128xf32>
      %c0_28 = arith.constant 0 : index
      %c0_29 = arith.constant 0 : index
      %c0_30 = arith.constant 0 : index
      %c0_31 = arith.constant 0 : index
      %41 = vector.load %arg4[%c0_28, %c0_29, %c0_30, %c0_31] : memref<1x2x8x128xf32, #tpu.memory_space<vmem>>, vector<1x2x8x128xf32>
      tpu.vector_store %arg4[%c0_28, %c0_29, %c0_30, %c0_31], %40 {strides = array<i32>} : memref<1x2x8x128xf32, #tpu.memory_space<vmem>>, vector<1x2x8x128xf32>,
    } else {
    }
    %cst = arith.constant 0.000000e+00 : f32
    %3 = vector.broadcast %cst : f32 to vector<8x128xf32>
    %c0 = arith.constant 0 : index
    %c0_1 = arith.constant 0 : index
    %4 = vector.load %arg2[%c0, %c0_1] : memref<16x128xf32, #tpu.memory_space<vmem>>, vector<16x128xf32>
    %c0_2 = arith.constant 0 : index
    %c0_3 = arith.constant 0 : index
    %5 = vector.load %arg3[%c0_2, %c0_3] : memref<16x128xf32, #tpu.memory_space<vmem>>, vector<16x128xf32>
    %cst_4 = arith.constant 5.000000e-01 : f32
    %6 = vector.broadcast %cst_4 : f32 to vector<16x128xf32>
    %7 = arith.mulf %6, %4 : vector<16x128xf32>
    %8 = math.tanh %7 : vector<16x128xf32>
    %cst_5 = arith.constant 5.000000e-01 : f32
    %9 = vector.broadcast %cst_5 : f32 to vector<16x128xf32>
    %10 = arith.mulf %9, %8 : vector<16x128xf32>
    %cst_6 = arith.constant 5.000000e-01 : f32
    %11 = vector.broadcast %cst_6 : f32 to vector<16x128xf32>
    %12 = arith.addf %10, %11 : vector<16x128xf32>
    %13 = arith.mulf %12, %5 : vector<16x128xf32>
    %14 = vector.shape_cast %13 : vector<16x128xf32> to vector<2x8x128xf32>
    %cst_7 = arith.constant dense<0.000000e+00> : vector<8x128xf32>
    %15 = vector.multi_reduction <add>, %14, %cst_7 [0] : vector<2x8x128xf32> to vector<8x128xf32>
    %16 = vector.shape_cast %12 : vector<16x128xf32> to vector<2x8x128xf32>
    %cst_8 = arith.constant dense<0.000000e+00> : vector<8x128xf32>
    %17 = vector.multi_reduction <add>, %16, %cst_8 [0] : vector<2x8x128xf32> to vector<8x128xf32>
    %18 = vector.shape_cast %5 : vector<16x128xf32> to vector<2x8x128xf32>
    %cst_9 = arith.constant dense<0.000000e+00> : vector<8x128xf32>
    %19 = vector.multi_reduction <add>, %18, %cst_9 [0] : vector<2x8x128xf32> to vector<8x128xf32>
    %20 = arith.addf %3, %15 : vector<8x128xf32>
    %21 = arith.addf %3, %17 : vector<8x128xf32>
    %22 = arith.addf %3, %19 : vector<8x128xf32>
    %c0_10 = arith.constant 0 : index
    %c0_11 = arith.constant 0 : index
    %c0_12 = arith.constant 0 : index
    %c0_13 = arith.constant 0 : index
    %23 = vector.load %arg4[%c0_10, %c0_11, %c0_12, %c0_13] : memref<1x2x8x128xf32, #tpu.memory_space<vmem>>, vector<1x1x8x128xf32>
    %24 = vector.shape_cast %23 : vector<1x1x8x128xf32> to vector<8x128xf32>
    %25 = arith.addf %24, %20 : vector<8x128xf32>
    %c0_14 = arith.constant 0 : index
    %c0_15 = arith.constant 0 : index
    %c0_16 = arith.constant 0 : index
    %c0_17 = arith.constant 0 : index
    %26 = vector.load %arg4[%c0_14, %c0_15, %c0_16, %c0_17] : memref<1x2x8x128xf32, #tpu.memory_space<vmem>>, vector<1x1x8x128xf32>
    %27 = vector.shape_cast %26 : vector<1x1x8x128xf32> to vector<8x128xf32>
    %28 = vector.shape_cast %25 : vector<8x128xf32> to vector<1x1x8x128xf32>
    tpu.vector_store %arg4[%c0_14, %c0_15, %c0_16, %c0_17], %28 {strides = array<i32>} : memref<1x2x8x128xf32, #tpu.memory_space<vmem>>, vector<1x1x8x128xf32>,
    %c0_18 = arith.constant 0 : index
    %c1 = arith.constant 1 : index
    %c0_19 = arith.constant 0 : index
    %c0_20 = arith.constant 0 : index
    %29 = vector.load %arg4[%c0_18, %c1, %c0_19, %c0_20] : memref<1x2x8x128xf32, #tpu.memory_space<vmem>>, vector<1x1x8x128xf32>
    %30 = vector.shape_cast %29 : vector<1x1x8x128xf32> to vector<8x128xf32>
    %cst_21 = arith.constant 5.000000e-01 : f32
    %31 = vector.broadcast %cst_21 : f32 to vector<8x128xf32>
    %32 = arith.mulf %31, %21 : vector<8x128xf32>
    %cst_22 = arith.constant 5.000000e-01 : f32
    %33 = vector.broadcast %cst_22 : f32 to vector<8x128xf32>
    %34 = arith.mulf %33, %22 : vector<8x128xf32>
    %35 = arith.addf %32, %34 : vector<8x128xf32>
    %36 = arith.addf %30, %35 : vector<8x128xf32>
    %c0_23 = arith.constant 0 : index
    %c1_24 = arith.constant 1 : index
    %c0_25 = arith.constant 0 : index
    %c0_26 = arith.constant 0 : index
    %37 = vector.load %arg4[%c0_23, %c1_24, %c0_25, %c0_26] : memref<1x2x8x128xf32, #tpu.memory_space<vmem>>, vector<1x1x8x128xf32>
    %38 = vector.shape_cast %37 : vector<1x1x8x128xf32> to vector<8x128xf32>
    %39 = vector.shape_cast %36 : vector<8x128xf32> to vector<1x1x8x128xf32>
    tpu.vector_store %arg4[%c0_23, %c1_24, %c0_25, %c0_26], %39 {strides = array<i32>} : memref<1x2x8x128xf32, #tpu.memory_space<vmem>>, vector<1x1x8x128xf32>,
    return
  }
  func.func @transform_0(%arg0: i32, %arg1: i32) -> (i32, i32) {
    %c1_i32 = arith.constant 1 : i32
    %0 = arith.muli %arg0, %c1_i32 : i32
    %1 = arith.addi %0, %arg1 : i32
    %c0_i32 = arith.constant 0 : i32
    %c0_i32_0 = arith.constant 0 : i32
    return %1, %c0_i32 : i32, i32
  }
  func.func @transform_1(%arg0: i32, %arg1: i32) -> (i32, i32) {
    %c1_i32 = arith.constant 1 : i32
    %0 = arith.muli %arg0, %c1_i32 : i32
    %1 = arith.addi %0, %arg1 : i32
    %c0_i32 = arith.constant 0 : i32
    %c0_i32_0 = arith.constant 0 : i32
    return %1, %c0_i32 : i32, i32
  }
  func.func @transform_2(%arg0: i32, %arg1: i32) -> (i32, i32, i32, i32) {
    %c0_i32 = arith.constant 0 : i32
    %c0_i32_0 = arith.constant 0 : i32
    %c0_i32_1 = arith.constant 0 : i32
    %c0_i32_2 = arith.constant 0 : i32
    return %arg0, %c0_i32, %c0_i32_0, %c0_i32_1 : i32, i32, i32, i32
  }
}

</mosaic_0001>

<llo_original>
// kernel: tpu_custom_call.1
$region0: #{tpu_custom_call.1}
  #allocation0 [shape = 'u32[]', space=smem, size = 0x4, offset = 0x4, fixed_abs, tag = 'smem constant byte address 0x4 - core index']
  #allocation1 [shape = 'u32[144,128]{1,0:T(1,128)}', space=vmem, size = 0x12000, scoped, tag = 'internal scratch']
  %s0 = inlined_call_operand.hbm [shape: f32[16,128], index: 0, kind: input, shape index: {}]
  %s1 = inlined_call_operand.hbm [shape: f32[16,128], index: 1, kind: input, shape index: {}]
  %s2 = inlined_call_operand.hbm [shape: f32[1,2,8,128], index: 2, kind: output, shape index: {}]
  %s3 = sld [smem:[#allocation0]]
  $region30: #{tpu_custom_call.1} parent=0
    _
  %s5 = ssub.s32 1, %s3
  %s6 = scalar_select 0, %s5, %s3
  $region1: #{tpu_custom_call.1} parent=0
    #allocation2 [shape = 'u8[8192]{0}', space=vmem, size = 0x2000, scoped, tag = 'input window, operand 0, single buffered']
    #allocation3 [shape = 's32[1]{0}', space=sflag, size = 0x4, scoped, tag = 'scoped memory for tpu_custom_call.1']
    #allocation4 [shape = 's32[1]{0}', space=sflag, size = 0x4, scoped, tag = 'scoped memory for tpu_custom_call.1']
    #allocation5 [shape = 'u8[8192]{0}', space=vmem, size = 0x2000, scoped, tag = 'input window, operand 1, single buffered']
    #allocation6 [shape = 's32[1]{0}', space=sflag, size = 0x4, scoped, tag = 'scoped memory for tpu_custom_call.1']
    #allocation7 [shape = 'u8[8192]{0}', space=vmem, size = 0x2000, scoped, tag = 'output window, operand 0, single buffered']
    %7 = vsyncpa [#allocation3], 0
    %8 = vsyncpa [#allocation6], 0
    %9 = vsyncpa [#allocation4], 0
    // Predicated region
    $region2: #{tpu_custom_call.1} parent=1 // pred_check
      _
    $region3: #{tpu_custom_call.1} parent=1 // pred_check_branch
      %11 = sbr.rel (0) target = $region5
    $region4: #{tpu_custom_call.1} parent=1 // pred_region
      %s12 = sadd.s32 0, 0
      %s13 = smul.u32 2, %s12
      %s15 = ssub.s32 256, 256
      %16 = vsyncadd [#allocation3], %s15
      %s17 = smul.addr %s13, 128
      %s18 = scalar_lea.hbm %s0, %s17
      %s19 = sshll.u32 [#allocation2], 4
      %s20 = int_to_ptr.vmem [resolvable:$true] %s19
      %25 = dma.hbm_to_vmem [thread:$0]  %s18, 256, %s20, [#allocation3], 128, 128, 8
    $region5: #{tpu_custom_call.1} parent=1 // pred_fallthru
      _
    // Predicated region
    $region6: #{tpu_custom_call.1} parent=1 // pred_check
      _
    $region7: #{tpu_custom_call.1} parent=1 // pred_check_branch
      %27 = sbr.rel (0) target = $region9
    $region8: #{tpu_custom_call.1} parent=1 // pred_region
      %s28 = sadd.s32 0, 0
      %s29 = smul.u32 2, %s28
      %s31 = ssub.s32 256, 256
      %32 = vsyncadd [#allocation6], %s31
      %s33 = smul.addr %s29, 128
      %s34 = scalar_lea.hbm %s1, %s33
      %s35 = sshll.u32 [#allocation5], 4
      %s36 = int_to_ptr.vmem [resolvable:$true] %s35
      %41 = dma.hbm_to_vmem [thread:$0]  %s34, 256, %s36, [#allocation6], 128, 128, 8
    $region9: #{tpu_custom_call.1} parent=1 // pred_fallthru
      _
    // Predicated region
    $region10: #{tpu_custom_call.1} parent=1 // pred_check
      _
    $region11: #{tpu_custom_call.1} parent=1 // pred_check_branch
      %43 = sbr.rel (0) target = $region13
    $region12: #{tpu_custom_call.1} parent=1 // pred_region
      %44 = dma.done [#allocation3], 256
    $region13: #{tpu_custom_call.1} parent=1 // pred_fallthru
      _
    // Predicated region
    $region14: #{tpu_custom_call.1} parent=1 // pred_check
      _
    $region15: #{tpu_custom_call.1} parent=1 // pred_check_branch
      %46 = sbr.rel (0) target = $region17
    $region16: #{tpu_custom_call.1} parent=1 // pred_region
      %47 = dma.done [#allocation6], 256
    $region17: #{tpu_custom_call.1} parent=1 // pred_fallthru
      _
    %s48 = sadd.s32 0, 0
    %s49 = smul.u32 2, %s48
    %s50 = sadd.s32 0, 0
    %s51 = smul.u32 2, %s50
    %p52 = scmp.eq.s32.totalorder 0, 0
    // Predicated region
    $region18: #{tpu_custom_call.1} parent=1 // pred_check
      %p53 = pneg %p52
    $region19: #{tpu_custom_call.1} parent=1 // pred_check_branch
      %55 = sbr.rel (%p53) target = $region21
    $region20: #{tpu_custom_call.1} parent=1 // pred_region
      %56 = vst [vmem:[#allocation7] sm:$0xff] 0.0
      %57 = vst [vmem:[#allocation7 + $0x8] sm:$0xff] 0.0
    $region21: #{tpu_custom_call.1} parent=1 // pred_fallthru
      _
    %v58 = vld [vmem:[#allocation2] sm:$0xff]
    %v59 = vld [vmem:[#allocation2 + $0x8] sm:$0xff]
    %v60 = vld [vmem:[#allocation5] sm:$0xff]
    %v61 = vld [vmem:[#allocation5 + $0x8] sm:$0xff]
    %v62 = vmul.f32 %v58, 0.5
    %v63 = vmul.f32 %v59, 0.5
    %v64 = vtanh.pop %v62
    %v65 = vtanh.pop %v63
    %v66 = vmul.f32 %v64, 0.5
    %v67 = vmul.f32 %v65, 0.5
    %v68 = vadd.f32 %v66, 0.5
    %v69 = vadd.f32 %v67, 0.5
    %v70 = vmul.f32 %v68, %v60
    %v71 = vmul.f32 %v69, %v61
    %v72 = vadd.f32 %v70, %v71
    %v73 = vadd.f32 %v68, %v69
    %v74 = vadd.f32 %v60, %v61
    %v75 = vadd.f32 %v72, 0.0
    %v76 = vadd.f32 %v73, 0.0
    %v77 = vadd.f32 %v74, 0.0
    %v78 = vld [vmem:[#allocation7] sm:$0xff]
    %v79 = vadd.f32 %v78, %v75
    %80 = vst [vmem:[#allocation7] sm:$0xff] %v79
    %s81 = scalar_lea.vmem [#allocation7], 8
    %v82 = vld [vmem:[%s81] sm:$0xff]
    %v83 = vmul.f32 %v76, 0.5
    %v84 = vmul.f32 %v77, 0.5
    %v85 = vadd.f32 %v83, %v84
    %v86 = vadd.f32 %v82, %v85
    %87 = vst [vmem:[%s81] sm:$0xff] %v86
    // Predicated region
    $region22: #{tpu_custom_call.1} parent=1 // pred_check
      _
    $region23: #{tpu_custom_call.1} parent=1 // pred_check_branch
      %89 = sbr.rel (0) target = $region25
    $region24: #{tpu_custom_call.1} parent=1 // pred_region
      %s91 = ssub.s32 256, 256
      %92 = vsyncadd [#allocation4], %s91
      %s93 = sshll.u32 [#allocation7], 4
      %s94 = int_to_ptr.vmem [resolvable:$true] %s93
      %99 = dma.vmem_to_hbm [thread:$0]  %s94, 256, %s2, [#allocation4], 128, 128, 8
    $region25: #{tpu_custom_call.1} parent=1 // pred_fallthru
      _
    // Predicated region
    $region26: #{tpu_custom_call.1} parent=1 // pred_check
      _
    $region27: #{tpu_custom_call.1} parent=1 // pred_check_branch
      %101 = sbr.rel (0) target = $region29
    $region28: #{tpu_custom_call.1} parent=1 // pred_region
      %102 = dma.done [#allocation4], 256
    $region29: #{tpu_custom_call.1} parent=1 // pred_fallthru
      _
    %103 = vsyncpa [#allocation3], 1
    %104 = vsyncpa [#allocation6], 1
    %105 = vsyncpa [#allocation4], 1

</llo_original>
